<compile_context>
chip_gen: v7x
topology: tpu7x:2x2x1
jax: 0.10.0
libtpu: 0.0.40
codegen_flags: <defaults>
</compile_context>

<pallas_src>
import jax
import jax.numpy as jnp
from jax.experimental import pallas as pl
from jax.experimental.pallas import tpu as pltpu

EPS = 1e-5
_LANE = 128
_MAX_TILE_B = 2048                       # rows; >=512 already reaches ~85% HBM roofline
_SMALL_INPUT_BYTES = 256 * 1024          # below this, skip pallas_call entirely


def _scaling_kernel(x_ref, s_ref, y_ref):
    """One broadcast multiply per (tile_b, tile_d) tile.

    x_ref : (tile_b, tile_d)  input tile, caller dtype
    s_ref : (1, tile_d)       effective per-feature scale (scale or 1/scale), fp32
    y_ref : (tile_b, tile_d)  output tile, caller dtype
    """
    y_ref[...] = (x_ref[...].astype(jnp.float32) * s_ref[...]).astype(y_ref.dtype)


def _round_up(n, m):
    return ((n + m - 1) // m) * m


def _vmem_budget():
    """Generation-aware scoped-VMEM limit and tile byte budget."""
    try:
        cap = int(pltpu.get_tpu_info().vmem_capacity_bytes)
    except Exception:
        cap = 64 * 1024 * 1024           # conservative fallback (works on v7x too)
    vmem_limit = min(cap // 2, 64 * 1024 * 1024)   # 64 MiB on v5e/v6e, 32 MiB on v7x
    tile_budget = (vmem_limit * 3) // 4            # 2x-buffered x + y tiles (+ scale)
    return vmem_limit, tile_budget


def scaling_forward(x: jax.Array, scale_param: jax.Array, reverse: bool = False,
                    *, force_pallas: bool = False):
    """NICE Scaling forward. x: (B, D), scale_param: (1, D). Returns (y, log_det)."""
    B, D = x.shape
    assert scale_param.shape == (1, D)
    in_dtype = x.dtype
    itemsize = jnp.dtype(in_dtype).itemsize

    # --- x-independent, O(D) work stays in the wrapper (hoisted out of the tiled loop)
    scale = jnp.exp(scale_param.astype(jnp.float32)) + EPS    # (1, D) fp32
    log_det = jnp.sum(jnp.log(scale))                         # scalar log|det J|
    eff = (1.0 / scale) if reverse else scale                 # fp32, computed once

    # --- small-input fast path: fixed pallas_call overhead dominates tiny tensors
    if not force_pallas and B * D * itemsize < _SMALL_INPUT_BYTES:
        y = (x.astype(jnp.float32) * eff).astype(in_dtype)
        return y, log_det

    vmem_limit, tile_budget = _vmem_budget()

    # min sublane tile depends on packing (fp32: 8 rows, bf16: 16, int8/fp8: 32)
    min_rows = {4: 8, 2: 16, 1: 32}.get(itemsize, 8)

    # --- feature-axis tiling only when an (min_rows, D) row strip would not fit
    # the budget with double-buffered in/out tiles; otherwise use full D so the
    # last dim needs no 128-alignment.
    def footprint_cols(cols):
        return 4 * min_rows * cols * itemsize + 2 * cols * 4   # x(2) + y(2) + scale(2)

    if footprint_cols(D) > tile_budget:
        per_col = 4 * min_rows * itemsize + 2 * 4
        tile_d = max(_LANE, ((tile_budget // per_col) // _LANE) * _LANE)
    else:
        tile_d = D

    # --- batch tile sized against the budget (2 buffers each for x-in and y-out)
    max_rows = max((tile_budget - 2 * tile_d * 4) // (4 * tile_d * itemsize), min_rows)
    tile_b = min(_MAX_TILE_B, max_rows, _round_up(B, min_rows))
    tile_b = max(min_rows, (tile_b // min_rows) * min_rows)

    # --- ensure >=2 grid steps so v7x's two TensorCores both stream (no-op cost
    # on single-TC v5e/v6e: one extra ~0.35us step)
    if pl.cdiv(B, tile_b) < 2 and B > min_rows:
        tile_b = max(min_rows, _round_up(pl.cdiv(B, 4), min_rows))

    grid = (pl.cdiv(B, tile_b), pl.cdiv(D, tile_d))

    y = pl.pallas_call(
        _scaling_kernel,
        out_shape=jax.ShapeDtypeStruct((B, D), in_dtype),
        grid=grid,
        in_specs=[
            pl.BlockSpec((tile_b, tile_d), lambda i, j: (i, j)),   # x tile, streamed
            pl.BlockSpec((1, tile_d), lambda i, j: (0, j)),        # scale, tiny, fp32
        ],
        out_specs=pl.BlockSpec((tile_b, tile_d), lambda i, j: (i, j)),
        compiler_params=pltpu.CompilerParams(
            dimension_semantics=("parallel", "parallel"),          # elementwise-safe
            vmem_limit_bytes=vmem_limit,
        ),
    )(x, eff)

    return y, log_det


def scaling_reference(x, scale_param, reverse=False):
    """Pure-JAX reference mirroring the PyTorch module."""
    scale = jnp.exp(scale_param.astype(jnp.float32)) + EPS
    log_det = jnp.sum(jnp.log(scale))
    xf = x.astype(jnp.float32)
    y = (xf / scale if reverse else xf * scale).astype(x.dtype)
    return y, log_det


if __name__ == "__main__":
    key = jax.random.PRNGKey(0)

    # (shape, dtype, force_pallas)
    cases = [
        ((8, 128), jnp.float32, False),    # tiny aligned: exercises the fast path
        ((10, 96), jnp.float32, True),     # unaligned B and D: masked partial blocks
        ((512, 384), jnp.float32, False),  # kernel path, multi-step batch grid
        ((256, 256), jnp.bfloat16, True),  # bf16 streaming through the kernel
    ]

    for (B, D), dt, force in cases:
        key, kx, ks = jax.random.split(key, 3)
        x = jax.random.normal(kx, (B, D), dtype=jnp.float32).astype(dt)
        scale_param = 0.1 * jax.random.normal(ks, (1, D), dtype=jnp.float32)

        for reverse in (False, True):
            y, ld = scaling_forward(x, scale_param, reverse=reverse, force_pallas=force)
            y = jax.block_until_ready(y)
            ld = jax.block_until_ready(ld)

            yr, ldr = scaling_reference(x, scale_param, reverse=reverse)

            tol = 1e-5 if dt == jnp.float32 else 2e-2
            assert y.dtype == x.dtype, (y.dtype, x.dtype)
            assert jnp.allclose(y.astype(jnp.float32), yr.astype(jnp.float32),
                                atol=tol, rtol=tol), (B, D, dt, reverse)
            assert jnp.allclose(ld, ldr, atol=1e-5, rtol=1e-5), (B, D, dt, reverse)

    print("KERNEL_OK")
</pallas_src>

<mosaic_0001>
module attributes {stable_mosaic.version = 11 : i64} {
  func.func @_scaling_kernel(%arg0: i32, %arg1: i32, %arg2: memref<8x96xf32, #tpu.memory_space<vmem>>, %arg3: memref<1x96xf32, #tpu.memory_space<vmem>>, %arg4: memref<8x96xf32, #tpu.memory_space<vmem>>) attributes {dimension_semantics = [#tpu.dimension_semantics<parallel>, #tpu.dimension_semantics<parallel>], iteration_bounds = array<i64: 2, 1>, scalar_prefetch = 0 : i64, scratch_operands = 0 : i64, tpu.core_type = #tpu.core_type<tc>, window_params = [{transform_indices = @transform_0, window_bounds = array<i64: 8, 96>}, {transform_indices = @transform_1, window_bounds = array<i64: 1, 96>}, {transform_indices = @transform_2, window_bounds = array<i64: 8, 96>}]} {
    %c0 = arith.constant 0 : index
    %c0_0 = arith.constant 0 : index
    %0 = vector.load %arg2[%c0, %c0_0] : memref<8x96xf32, #tpu.memory_space<vmem>>, vector<8x96xf32>
    %c0_1 = arith.constant 0 : index
    %c0_2 = arith.constant 0 : index
    %1 = vector.load %arg3[%c0_1, %c0_2] : memref<1x96xf32, #tpu.memory_space<vmem>>, vector<1x96xf32>
    %2 = vector.broadcast %1 : vector<1x96xf32> to vector<8x96xf32>
    %3 = arith.mulf %0, %2 : vector<8x96xf32>
    %c0_3 = arith.constant 0 : index
    %c0_4 = arith.constant 0 : index
    %4 = vector.load %arg4[%c0_3, %c0_4] : memref<8x96xf32, #tpu.memory_space<vmem>>, vector<8x96xf32>
    tpu.vector_store %arg4[%c0_3, %c0_4], %3 {strides = array<i32>} : memref<8x96xf32, #tpu.memory_space<vmem>>, vector<8x96xf32>,
    return
  }
  func.func @transform_0(%arg0: i32, %arg1: i32) -> (i32, i32) {
    %c0_i32 = arith.constant 0 : i32
    return %arg0, %arg1 : i32, i32
  }
  func.func @transform_1(%arg0: i32, %arg1: i32) -> (i32, i32) {
    %c0_i32 = arith.constant 0 : i32
    %c0_i32_0 = arith.constant 0 : i32
    return %c0_i32, %arg1 : i32, i32
  }
  func.func @transform_2(%arg0: i32, %arg1: i32) -> (i32, i32) {
    %c0_i32 = arith.constant 0 : i32
    return %arg0, %arg1 : i32, i32
  }
}

</mosaic_0001>

<llo_original>
// kernel: tpu_custom_call.1
$region0: #{tpu_custom_call.1}
  #allocation0 [shape = 'u32[]', space=smem, size = 0x4, offset = 0x4, fixed_abs, tag = 'smem constant byte address 0x4 - core index']
  #allocation1 [shape = 'u32[144,128]{1,0:T(1,128)}', space=vmem, size = 0x12000, scoped, tag = 'internal scratch']
  %s0 = inlined_call_operand.hbm [shape: f32[10,96], index: 0, kind: input, shape index: {}]
  %s1 = inlined_call_operand.vmem [shape: f32[1,96], index: 1, kind: input, shape index: {}]
  %s2 = inlined_call_operand.hbm [shape: f32[10,96], index: 2, kind: output, shape index: {}]
  %s3 = sld [smem:[#allocation0]]
  $region45: #{tpu_custom_call.1} parent=0
    _
  %s5 = ssub.s32 1, %s3
  %s6 = scalar_select 0, %s5, %s3
  $region1: #{tpu_custom_call.1} parent=0
    #allocation2 [shape = 'u8[8192]{0}', space=vmem, size = 0x2000, scoped, tag = 'input window, operand 0']
    #allocation3 [shape = 's32[2]{0}', space=sflag, size = 0x8, scoped, tag = 'scoped memory for tpu_custom_call.1']
    #allocation4 [shape = 's32[2]{0}', space=sflag, size = 0x8, scoped, tag = 'scoped memory for tpu_custom_call.1']
    #allocation5 [shape = 'u8[8192]{0}', space=vmem, size = 0x2000, scoped, tag = 'output window, operand 0']
    %7 = vsyncpa [#allocation3], 0
    %s8 = scalar_lea.sflag [#allocation3], 1
    %9 = vsyncpa %s8, 0
    %10 = vsyncpa [#allocation4], 0
    %s11 = scalar_lea.sflag [#allocation4], 1
    %12 = vsyncpa %s11, 0
    loop: start=0, step=1, limit=4
    $region2: #{tpu_custom_call.1} parent=1 // loop_pre_header
      _
    $region3: #{tpu_custom_call.1} parent=1 // loop_header
      %s14 = sphi 0, %s18
      %p15 = scmp.ge.s32.totalorder %s14, 4
      %s21 = sphi 0, %s33
      %s22 = sphi 0, %s29
      %s23 = sphi 0, %s21
      %s24 = sphi 0, %s22
      %s25 = sphi 0, %s23
      %s26 = sphi 0, %s24
      %s38 = sphi 0, %s40
      %s41 = sphi 0, %s38
      %s42 = sphi 0, %s41
      %s58 = sphi 0, %s42
      %s64 = sphi 0, %s66
      %s67 = sphi 0, %s64
      %s68 = sphi 0, %s67
      %s84 = sphi 0, %s68
      %s92 = sphi 0, %s94
      %s95 = sphi 0, %s92
      %s96 = sphi 0, %s95
      %s112 = sphi 0, %s96
    $region4: #{tpu_custom_call.1} parent=1 // loop_header_branch
      %17 = sbr.rel (%p15) target = $region8
    $region5: #{tpu_custom_call.1} parent=1 // loop_body
      %s19 = ssub.s32 %s14, 1
      %s20 = ssub.s32 %s14, 2
      %s27 = sadd.s32 1, %s22
      %p28 = scmp.ge.s32.totalorder %s27, 1
      %s29 = scalar_select %p28, 0, %s27
      %s30 = sadd.s32 1, %s21
      %s31 = scalar_select %p28, %s30, %s21
      %p32 = scmp.ge.s32.totalorder %s31, 2
      %s33 = scalar_select %p32, 0, %s31
      %s34 = ssub.s32 %s21, %s33
      %s35 = ssub.s32 %s22, %s29
      %s36 = sor.u32 %s34, %s35
      %p37 = scmp.eq.s32.totalorder %s36, 0
      %s39 = sadd.s32 %s38, 1
      %s40 = scalar_select %p37, %s38, %s39
      %p43 = pneg %p37
      %p44 = scmp.eq.s32.totalorder %s14, 1
      %p45 = por %p43, %p44
      %p46 = scmp.ne.s32.totalorder %s38, %s41
      %p47 = scmp.eq.s32.totalorder %s14, 0
      %p48 = por %p46, %p47
      %p49 = scmp.ne.s32.totalorder %s38, %s41
      %p50 = scmp.eq.s32.totalorder %s19, 1
      %p51 = por %p49, %p50
      %p52 = scmp.ne.s32.totalorder %s41, %s42
      %p53 = scmp.eq.s32.totalorder %s19, 0
      %p54 = por %p52, %p53
      %p55 = scmp.ne.s32.totalorder %s41, %s42
      %p56 = scmp.eq.s32.totalorder %s20, 1
      %p57 = por %p55, %p56
      %p59 = scmp.ne.s32.totalorder %s42, %s58
      %p60 = scmp.eq.s32.totalorder %s20, 0
      %p61 = por %p59, %p60
      %s62 = ssub.s32 %s22, %s29
      %p63 = scmp.eq.s32.totalorder %s62, 0
      %s65 = sadd.s32 %s64, 1
      %s66 = scalar_select %p63, %s64, %s65
      %p69 = pneg %p63
      %p70 = scmp.eq.s32.totalorder %s14, 1
      %p71 = por %p69, %p70
      %p72 = scmp.ne.s32.totalorder %s64, %s67
      %p73 = scmp.eq.s32.totalorder %s14, 0
      %p74 = por %p72, %p73
      %p75 = scmp.ne.s32.totalorder %s64, %s67
      %p76 = scmp.eq.s32.totalorder %s19, 1
      %p77 = por %p75, %p76
      %p78 = scmp.ne.s32.totalorder %s67, %s68
      %p79 = scmp.eq.s32.totalorder %s19, 0
      %p80 = por %p78, %p79
      %p81 = scmp.ne.s32.totalorder %s67, %s68
      %p82 = scmp.eq.s32.totalorder %s20, 1
      %p83 = por %p81, %p82
      %p85 = scmp.ne.s32.totalorder %s68, %s84
      %p86 = scmp.eq.s32.totalorder %s20, 0
      %p87 = por %p85, %p86
      %s88 = ssub.s32 %s21, %s33
      %s89 = ssub.s32 %s22, %s29
      %s90 = sor.u32 %s88, %s89
      %p91 = scmp.eq.s32.totalorder %s90, 0
      %s93 = sadd.s32 %s92, 1
      %s94 = scalar_select %p91, %s92, %s93
      %p97 = pneg %p91
      %p98 = scmp.eq.s32.totalorder %s14, 1
      %p99 = por %p97, %p98
      %p100 = scmp.ne.s32.totalorder %s92, %s95
      %p101 = scmp.eq.s32.totalorder %s14, 0
      %p102 = por %p100, %p101
      %p103 = scmp.ne.s32.totalorder %s92, %s95
      %p104 = scmp.eq.s32.totalorder %s19, 1
      %p105 = por %p103, %p104
      %p106 = scmp.ne.s32.totalorder %s95, %s96
      %p107 = scmp.eq.s32.totalorder %s19, 0
      %p108 = por %p106, %p107
      %p109 = scmp.ne.s32.totalorder %s95, %s96
      %p110 = scmp.eq.s32.totalorder %s20, 1
      %p111 = por %p109, %p110
      %p113 = scmp.ne.s32.totalorder %s96, %s112
      %p114 = scmp.eq.s32.totalorder %s20, 0
      %p115 = por %p113, %p114
      %p116 = scmp.le.s32.totalorder 1, %s14
      %p117 = scmp.lt.s32.totalorder %s14, 3
      %p118 = pnand %p116, %p117
      %p119 = pneg %p118
      // Predicated region
      $region9: #{tpu_custom_call.1} parent=5 // pred_check
        _
      $region10: #{tpu_custom_call.1} parent=5 // pred_check_branch
        %121 = sbr.rel (%p118) target = $region12
      $region11: #{tpu_custom_call.1} parent=5 // pred_region
        %s122 = ssub.s32 %s14, 1
        // Predicated region
        $region13: #{tpu_custom_call.1} parent=11 // pred_check
          %p123 = pneg %p80
        $region14: #{tpu_custom_call.1} parent=11 // pred_check_branch
          %125 = sbr.rel (%p123) target = $region16
        $region15: #{tpu_custom_call.1} parent=11 // pred_region
          %p126 = scmp.lt.s32.totalorder %s24, 0
          %s127 = scalar_select %p126, %s24, 0
          %s128 = scalar_lea.vmem %s1, %s127
        $region16: #{tpu_custom_call.1} parent=11 // pred_fallthru
          _
      $region12: #{tpu_custom_call.1} parent=5 // pred_fallthru
        _
      %p129 = scmp.lt.s32.totalorder %s14, 2
      // Predicated region
      $region17: #{tpu_custom_call.1} parent=5 // pred_check
        %p130 = pneg %p129
      $region18: #{tpu_custom_call.1} parent=5 // pred_check_branch
        %132 = sbr.rel (%p130) target = $region20
      $region19: #{tpu_custom_call.1} parent=5 // pred_region
        // Predicated region
        $region21: #{tpu_custom_call.1} parent=19 // pred_check
          %p133 = pneg %p48
        $region22: #{tpu_custom_call.1} parent=19 // pred_check_branch
          %135 = sbr.rel (%p133) target = $region24
        $region23: #{tpu_custom_call.1} parent=19 // pred_region
          %s136 = sand.u32 %s38, 1
          %s137 = scalar_lea.sflag [#allocation3], %s136
          %s138 = sand.u32 %s38, 1
          %s139 = smul.addr %s138, 8
          %s140 = scalar_lea.vmem [#allocation2], %s139
          %s142 = ssub.s32 128, 128
          %143 = vsyncadd %s137, %s142
          %s144 = sadd.s32 %s22, %s21
          %s145 = smul.addr %s144, 128
          %s146 = scalar_lea.hbm %s0, %s145
          %s148 = sshll.u32 %s140, 4
          %s149 = int_to_ptr.vmem [resolvable:$true] %s148
          %151 = dma.hbm_to_vmem [thread:$0]  %s146, 128, %s149, %s137
        $region24: #{tpu_custom_call.1} parent=19 // pred_fallthru
          _
      $region20: #{tpu_custom_call.1} parent=5 // pred_fallthru
        _
      %p152 = scmp.le.s32.totalorder 1, %s14
      %p153 = scmp.lt.s32.totalorder %s14, 3
      %p154 = pnand %p152, %p153
      %p155 = pneg %p154
      // Predicated region
      $region25: #{tpu_custom_call.1} parent=5 // pred_check
        _
      $region26: #{tpu_custom_call.1} parent=5 // pred_check_branch
        %157 = sbr.rel (%p154) target = $region28
      $region27: #{tpu_custom_call.1} parent=5 // pred_region
        %s158 = ssub.s32 %s14, 1
        %s159 = sand.u32 %s41, 1
        %s160 = scalar_lea.sflag [#allocation3], %s159
        %s161 = sand.u32 %s41, 1
        %s162 = smul.addr %s161, 8
        %s163 = scalar_lea.vmem [#allocation2], %s162
        // Predicated region
        $region29: #{tpu_custom_call.1} parent=27 // pred_check
          %p164 = pneg %p54
        $region30: #{tpu_custom_call.1} parent=27 // pred_check_branch
          %166 = sbr.rel (%p164) target = $region32
        $region31: #{tpu_custom_call.1} parent=27 // pred_region
          %167 = dma.done %s160, 128
        $region32: #{tpu_custom_call.1} parent=27 // pred_fallthru
          _
        %s168 = sand.u32 %s41, 1
        %s169 = scalar_lea.sflag [#allocation3], %s168
        %s170 = sand.u32 %s41, 1
        %s171 = smul.addr %s170, 8
        %s172 = scalar_lea.vmem [#allocation2], %s171
        %p173 = pneg %p54
        %p174 = pneg %p51
        %p175 = scmp.lt.s32.totalorder %s24, 0
        %s176 = scalar_select %p175, %s24, 0
        %s177 = scalar_lea.vmem %s1, %s176
        %p178 = pneg %p80
        %p179 = pneg %p77
        %p180 = pneg %p108
        %p181 = pneg %p105
        %s182 = sand.u32 %s95, 1
        %s183 = scalar_lea.sflag [#allocation4], %s182
        %s184 = sand.u32 %s95, 1
        %s185 = smul.addr %s184, 8
        %s186 = scalar_lea.vmem [#allocation5], %s185
        %p187 = scmp.lt.s32.totalorder %s24, 0
        %s188 = scalar_select %p187, %s24, 0
        %s189 = scalar_lea.vmem %s1, %s188
        %v190 = vld [vmem:[%s163] sm:$0xff]
        %v191 = vld [vmem:[%s189] sm:$0x1]
        %v193 = vlaneseq
        %v194 = vshrl.u32 %v193, 7
        %v195 = vsub.s32 0, %v194
        %v196 = vrot.slane %v191, %v195
        %v198 = vmul.f32 %v190, %v196
        %vm199 = vcmask 785408
        %200 = vst.msk [vmem:[%s186] sm:$0xff] %vm199, %v198
        %s201 = sand.u32 %s95, 1
        %s202 = scalar_lea.sflag [#allocation4], %s201
        %s203 = sand.u32 %s95, 1
        %s204 = smul.addr %s203, 8
        %s205 = scalar_lea.vmem [#allocation5], %s204
        // Predicated region
        $region33: #{tpu_custom_call.1} parent=27 // pred_check
          %p206 = pneg %p105
        $region34: #{tpu_custom_call.1} parent=27 // pred_check_branch
          %208 = sbr.rel (%p206) target = $region36
        $region35: #{tpu_custom_call.1} parent=27 // pred_region
          %s210 = ssub.s32 128, 128
          %211 = vsyncadd %s202, %s210
          %s212 = sadd.s32 %s24, %s23
          %s213 = smul.addr %s212, 128
          %s214 = scalar_lea.hbm %s2, %s213
          %s216 = sshll.u32 %s205, 4
          %s217 = int_to_ptr.vmem [resolvable:$true] %s216
          %219 = dma.vmem_to_hbm [thread:$0]  %s217, 128, %s214, %s202
        $region36: #{tpu_custom_call.1} parent=27 // pred_fallthru
          _
      $region28: #{tpu_custom_call.1} parent=5 // pred_fallthru
        _
      %p220 = scmp.le.s32.totalorder 2, %s14
      // Predicated region
      $region37: #{tpu_custom_call.1} parent=5 // pred_check
        %p221 = pneg %p220
      $region38: #{tpu_custom_call.1} parent=5 // pred_check_branch
        %223 = sbr.rel (%p221) target = $region40
      $region39: #{tpu_custom_call.1} parent=5 // pred_region
        %s224 = ssub.s32 %s14, 2
        // Predicated region
        $region41: #{tpu_custom_call.1} parent=39 // pred_check
          %p225 = pneg %p111
        $region42: #{tpu_custom_call.1} parent=39 // pred_check_branch
          %227 = sbr.rel (%p225) target = $region44
        $region43: #{tpu_custom_call.1} parent=39 // pred_region
          %s228 = sand.u32 %s96, 1
          %s229 = scalar_lea.sflag [#allocation4], %s228
          %s230 = sand.u32 %s96, 1
          %s231 = smul.addr %s230, 8
          %s232 = scalar_lea.vmem [#allocation5], %s231
          %233 = dma.done %s229, 128
        $region44: #{tpu_custom_call.1} parent=39 // pred_fallthru
          _
      $region40: #{tpu_custom_call.1} parent=5 // pred_fallthru
        _
    $region6: #{tpu_custom_call.1} parent=1 // loop_footer
      %s18 = sadd.s32 1, %s14
    $region7: #{tpu_custom_call.1} parent=1 // loop_footer_branch
      %13 = sbr.rel target = $region3
    $region8: #{tpu_custom_call.1} parent=1 // loop_exit
      _
    %234 = vsyncpa [#allocation3], 1
    %s235 = scalar_lea.sflag [#allocation3], 1
    %236 = vsyncpa %s235, 1
    %237 = vsyncpa [#allocation4], 1
    %s238 = scalar_lea.sflag [#allocation4], 1
    %239 = vsyncpa %s238, 1

</llo_original>
